<compile_context>
chip_gen: v7x
topology: tpu7x:2x2x1
jax: 0.10.0
libtpu: 0.0.40
codegen_flags: <defaults>
</compile_context>

<pallas_src>
import jax
import jax.numpy as jnp
from jax import lax
from jax.experimental import pallas as pl
from jax.experimental.pallas import tpu as pltpu

_LANE_C = 1024   # lane-dense last dim (multiple of 128)
_MAX_TR = 512    # rows per block: (512, 1024) f32 = 2 MiB per buffer


def _logistic_kernel(w_ref, b_ref, x_ref, o_ref):
    # out = 1 / (1 + exp(w*x + b))
    w = w_ref[0, 0]
    b = b_ref[0, 0]
    lin = w * x_ref[...] + b
    o_ref[...] = pl.reciprocal(1.0 + jnp.exp(lin), approx=False)


def _round_up(n, m):
    return (n + m - 1) // m * m


@jax.jit
def my_model_forward(x, w, b):
    """x: any shape, f32; w, b: (1,) f32 -> same shape as x."""
    orig_shape = x.shape
    orig_dtype = x.dtype

    xf = x.astype(jnp.float32).reshape(-1)
    n = xf.shape[0]

    # Repack into a lane-dense 2D slab, padded so the grid divides evenly.
    rows = -(-n // _LANE_C)                              # cdiv
    tr = _MAX_TR if rows >= _MAX_TR else _round_up(rows, 8)
    rows_p = _round_up(rows, tr)
    total = rows_p * _LANE_C
    if total != n:
        xf = jnp.pad(xf, (0, total - n))
    x2 = xf.reshape(rows_p, _LANE_C)

    w2 = w.reshape(1, 1).astype(jnp.float32)
    b2 = b.reshape(1, 1).astype(jnp.float32)

    out2 = pl.pallas_call(
        _logistic_kernel,
        out_shape=jax.ShapeDtypeStruct((rows_p, _LANE_C), jnp.float32),
        grid=(rows_p // tr,),
        in_specs=[
            pl.BlockSpec(memory_space=pltpu.SMEM),           # w
            pl.BlockSpec(memory_space=pltpu.SMEM),           # b
            pl.BlockSpec((tr, _LANE_C), lambda i: (i, 0)),   # x tile
        ],
        out_specs=pl.BlockSpec((tr, _LANE_C), lambda i: (i, 0)),
        compiler_params=pltpu.CompilerParams(
            dimension_semantics=("parallel",),     # megacore sharding on v7x
            vmem_limit_bytes=32 * 1024 * 1024,     # raise v5e's 16 MiB default
        ),
    )(w2, b2, x2)

    out = out2.reshape(-1)[:n].reshape(orig_shape)
    return out.astype(orig_dtype)


if __name__ == "__main__":
    key = jax.random.PRNGKey(0)
    kx, kw = jax.random.split(key)

    # small shapes consistent with the elementwise forward
    x = jax.random.normal(kx, (8, 128), dtype=jnp.float32)
    # deterministic param init: w ~ randn(1), b = zeros(1)
    w = jax.random.normal(kw, (1,), dtype=jnp.float32)
    b = jnp.zeros((1,), dtype=jnp.float32)

    out = my_model_forward(x, w, b)
    jax.block_until_ready(out)

    # reference check in plain JAX
    ref = 1.0 / (1.0 + jnp.exp(w[0] * x + b[0]))
    assert jnp.allclose(out, ref, atol=1e-5, rtol=1e-5)

    # also exercise the padding / repacking path with a non-aligned shape
    x2 = jax.random.normal(jax.random.PRNGKey(1), (3, 5, 37), dtype=jnp.float32)
    out2 = my_model_forward(x2, w, b)
    jax.block_until_ready(out2)
    ref2 = 1.0 / (1.0 + jnp.exp(w[0] * x2 + b[0]))
    assert jnp.allclose(out2, ref2, atol=1e-5, rtol=1e-5)

    print("KERNEL_OK")
</pallas_src>

<mosaic_0001>
module attributes {stable_mosaic.version = 11 : i64} {
  func.func @_logistic_kernel(%arg0: i32, %arg1: memref<1x1xf32, #tpu.memory_space<smem>>, %arg2: memref<1x1xf32, #tpu.memory_space<smem>>, %arg3: memref<8x1024xf32, #tpu.memory_space<vmem>>, %arg4: memref<8x1024xf32, #tpu.memory_space<vmem>>) attributes {dimension_semantics = [#tpu.dimension_semantics<parallel>], iteration_bounds = array<i64: 1>, scalar_prefetch = 0 : i64, scratch_operands = 0 : i64, tpu.core_type = #tpu.core_type<tc>, window_params = [{transform_indices = @transform_0, window_bounds = array<i64: 1, 1>}, {transform_indices = @transform_1, window_bounds = array<i64: 1, 1>}, {transform_indices = @transform_2, window_bounds = array<i64: 8, 1024>}, {transform_indices = @transform_3, window_bounds = array<i64: 8, 1024>}]} {
    %c0 = arith.constant 0 : index
    %c0_0 = arith.constant 0 : index
    %0 = memref.load %arg1[%c0, %c0_0] : memref<1x1xf32, #tpu.memory_space<smem>>
    %c0_1 = arith.constant 0 : index
    %c0_2 = arith.constant 0 : index
    %1 = memref.load %arg2[%c0_1, %c0_2] : memref<1x1xf32, #tpu.memory_space<smem>>
    %c0_3 = arith.constant 0 : index
    %c0_4 = arith.constant 0 : index
    %2 = vector.load %arg3[%c0_3, %c0_4] : memref<8x1024xf32, #tpu.memory_space<vmem>>, vector<8x1024xf32>
    %3 = vector.broadcast %0 : f32 to vector<8x1024xf32>
    %4 = arith.mulf %3, %2 : vector<8x1024xf32>
    %5 = vector.broadcast %1 : f32 to vector<8x1024xf32>
    %6 = arith.addf %4, %5 : vector<8x1024xf32>
    %7 = math.exp %6 : vector<8x1024xf32>
    %cst = arith.constant 1.000000e+00 : f32
    %8 = vector.broadcast %cst : f32 to vector<8x1024xf32>
    %9 = arith.addf %8, %7 : vector<8x1024xf32>
    %10 = tpu.reciprocal %9 : vector<8x1024xf32> -> vector<8x1024xf32>
    %c0_5 = arith.constant 0 : index
    %c0_6 = arith.constant 0 : index
    %11 = vector.load %arg4[%c0_5, %c0_6] : memref<8x1024xf32, #tpu.memory_space<vmem>>, vector<8x1024xf32>
    tpu.vector_store %arg4[%c0_5, %c0_6], %10 {strides = array<i32>} : memref<8x1024xf32, #tpu.memory_space<vmem>>, vector<8x1024xf32>,
    return
  }
  func.func @transform_0(%arg0: i32) -> (i32, i32) {
    %c0_i32 = arith.constant 0 : i32
    %c0_i32_0 = arith.constant 0 : i32
    %c0_i32_1 = arith.constant 0 : i32
    return %c0_i32, %c0_i32_0 : i32, i32
  }
  func.func @transform_1(%arg0: i32) -> (i32, i32) {
    %c0_i32 = arith.constant 0 : i32
    %c0_i32_0 = arith.constant 0 : i32
    %c0_i32_1 = arith.constant 0 : i32
    return %c0_i32, %c0_i32_0 : i32, i32
  }
  func.func @transform_2(%arg0: i32) -> (i32, i32) {
    %c0_i32 = arith.constant 0 : i32
    %c0_i32_0 = arith.constant 0 : i32
    return %arg0, %c0_i32 : i32, i32
  }
  func.func @transform_3(%arg0: i32) -> (i32, i32) {
    %c0_i32 = arith.constant 0 : i32
    %c0_i32_0 = arith.constant 0 : i32
    return %arg0, %c0_i32 : i32, i32
  }
}

</mosaic_0001>

<llo_original>
// kernel: my_model_forward.1
$region0: #{my_model_forward.1}
  #allocation0 [shape = 'u32[]', space=smem, size = 0x4, offset = 0x4, fixed_abs, tag = 'smem constant byte address 0x4 - core index']
  #allocation1 [shape = 'u32[144,128]{1,0:T(1,128)}', space=vmem, size = 0x12000, scoped, tag = 'internal scratch']
  #allocation2 [shape = 'f32[1,1]{1,0:T(1,128)S(6)}', space=smem, size = 0x200, scoped, tag = 'scoped memory for my_model_forward.1']
  #allocation3 [shape = 'f32[1,1]{1,0:T(1,128)S(6)}', space=smem, size = 0x200, scoped, tag = 'scoped memory for my_model_forward.1']
  %s0 = inlined_call_operand.<no memory space> [shape: f32[1,1], index: 0, kind: input, shape index: {}]
  %s1 = inlined_call_operand.<no memory space> [shape: f32[1,1], index: 1, kind: input, shape index: {}]
  %s2 = inlined_call_operand.vmem [shape: f32[8,1024], index: 2, kind: input, shape index: {}]
  %s3 = inlined_call_operand.vmem [shape: f32[8,1024], index: 3, kind: output, shape index: {}]
  %s4 = sld [smem:[#allocation0]]
  $region22: #{my_model_forward.1} parent=0
    _
  %s6 = ssub.s32 1, %s4
  %s7 = scalar_select 0, %s6, %s4
  %8 = sst [smem:[#allocation2]] %s0
  %9 = sst [smem:[#allocation3]] %s1
  // Predicated region
  $region2: #{my_model_forward.1} parent=0 // pred_check
    _
  $region3: #{my_model_forward.1} parent=0 // pred_check_branch
    %11 = sbr.rel (0) target = $region5
  $region4: #{my_model_forward.1} parent=0 // pred_region
    _
  $region5: #{my_model_forward.1} parent=0 // pred_fallthru
    _
  // Predicated region
  $region6: #{my_model_forward.1} parent=0 // pred_check
    _
  $region7: #{my_model_forward.1} parent=0 // pred_check_branch
    %13 = sbr.rel (0) target = $region9
  $region8: #{my_model_forward.1} parent=0 // pred_region
    _
  $region9: #{my_model_forward.1} parent=0 // pred_fallthru
    _
  // Predicated region
  $region10: #{my_model_forward.1} parent=0 // pred_check
    _
  $region11: #{my_model_forward.1} parent=0 // pred_check_branch
    %15 = sbr.rel (0) target = $region13
  $region12: #{my_model_forward.1} parent=0 // pred_region
    _
  $region13: #{my_model_forward.1} parent=0 // pred_fallthru
    _
  %s16 = sld [smem:[#allocation2]]
  %s17 = sld [smem:[#allocation3]]
  %v18 = vld [vmem:[%s2] sm:$0xff]
  %v19 = vld [vmem:[%s2 + $0x8] sm:$0xff]
  %v20 = vld [vmem:[%s2 + $0x10] sm:$0xff]
  %v21 = vld [vmem:[%s2 + $0x18] sm:$0xff]
  %v22 = vld [vmem:[%s2 + $0x20] sm:$0xff]
  %v23 = vld [vmem:[%s2 + $0x28] sm:$0xff]
  %v24 = vld [vmem:[%s2 + $0x30] sm:$0xff]
  %v25 = vld [vmem:[%s2 + $0x38] sm:$0xff]
  %v26 = vstv %s16
  %v27 = vmul.f32 %v26, %v18
  %v28 = vmul.f32 %v26, %v19
  %v29 = vmul.f32 %v26, %v20
  %v30 = vmul.f32 %v26, %v21
  %v31 = vmul.f32 %v26, %v22
  %v32 = vmul.f32 %v26, %v23
  %v33 = vmul.f32 %v26, %v24
  %v34 = vmul.f32 %v26, %v25
  %v35 = vstv %s17
  %v36 = vadd.f32 %v27, %v35
  %v37 = vadd.f32 %v28, %v35
  %v38 = vadd.f32 %v29, %v35
  %v39 = vadd.f32 %v30, %v35
  %v40 = vadd.f32 %v31, %v35
  %v41 = vadd.f32 %v32, %v35
  %v42 = vadd.f32 %v33, %v35
  %v43 = vadd.f32 %v34, %v35
  %v44 = vmul.f32 %v36, 1.442695
  %v45 = vpow.pop %v44
  %v46 = vmul.f32 %v37, 1.442695
  %v47 = vpow.pop %v46
  %v48 = vmul.f32 %v38, 1.442695
  %v49 = vpow.pop %v48
  %v50 = vmul.f32 %v39, 1.442695
  %v51 = vpow.pop %v50
  %v52 = vmul.f32 %v40, 1.442695
  %v53 = vpow.pop %v52
  %v54 = vmul.f32 %v41, 1.442695
  %v55 = vpow.pop %v54
  %v56 = vmul.f32 %v42, 1.442695
  %v57 = vpow.pop %v56
  %v58 = vmul.f32 %v43, 1.442695
  %v59 = vpow.pop %v58
  %v60 = vadd.f32 %v45, 1.0
  %v61 = vadd.f32 %v47, 1.0
  %v62 = vadd.f32 %v49, 1.0
  %v63 = vadd.f32 %v51, 1.0
  %v64 = vadd.f32 %v53, 1.0
  %v65 = vadd.f32 %v55, 1.0
  %v66 = vadd.f32 %v57, 1.0
  %v67 = vadd.f32 %v59, 1.0
  %v68 = vrcp.pop %v60
  %v69 = vrcp.pop %v61
  %v70 = vrcp.pop %v62
  %v71 = vrcp.pop %v63
  %v72 = vrcp.pop %v64
  %v73 = vrcp.pop %v65
  %v74 = vrcp.pop %v66
  %v75 = vrcp.pop %v67
  %76 = vst [vmem:[%s3] sm:$0xff] %v68
  %77 = vst [vmem:[%s3 + $0x8] sm:$0xff] %v69
  %78 = vst [vmem:[%s3 + $0x10] sm:$0xff] %v70
  %79 = vst [vmem:[%s3 + $0x18] sm:$0xff] %v71
  %80 = vst [vmem:[%s3 + $0x20] sm:$0xff] %v72
  %81 = vst [vmem:[%s3 + $0x28] sm:$0xff] %v73
  %82 = vst [vmem:[%s3 + $0x30] sm:$0xff] %v74
  %83 = vst [vmem:[%s3 + $0x38] sm:$0xff] %v75
  // Predicated region
  $region14: #{my_model_forward.1} parent=0 // pred_check
    _
  $region15: #{my_model_forward.1} parent=0 // pred_check_branch
    %85 = sbr.rel (0) target = $region17
  $region16: #{my_model_forward.1} parent=0 // pred_region
    _
  $region17: #{my_model_forward.1} parent=0 // pred_fallthru
    _
  // Predicated region
  $region18: #{my_model_forward.1} parent=0 // pred_check
    _
  $region19: #{my_model_forward.1} parent=0 // pred_check_branch
    %87 = sbr.rel (0) target = $region21
  $region20: #{my_model_forward.1} parent=0 // pred_region
    _
  $region21: #{my_model_forward.1} parent=0 // pred_fallthru
    _

</llo_original>
